<compile_context>
chip_gen: v7x
topology: tpu7x:2x2x1
jax: 0.10.0
libtpu: 0.0.40
codegen_flags: <defaults>
</compile_context>

<pallas_src>
import math

import jax
import jax.numpy as jnp
from jax.experimental import pallas as pl
from jax.experimental.pallas import tpu as pltpu


def _pos_encoding_kernel(freq_ref, off_ref, x_ref, o_ref):
    """One (block_rows, L) tile: out = x + sin(pos * freq + offset)."""
    block_rows = x_ref.shape[0]

    base = (pl.program_id(0) * block_rows).astype(jnp.float32)
    row = jax.lax.broadcasted_iota(jnp.int32, (block_rows, 1), 0).astype(jnp.float32)
    pos = base + row                                       # folded-row index, (block_rows, 1)

    # Single broadcast FMA: (block_rows,1) * (1,L) + (1,L) -> (block_rows, L)
    angle = pos * freq_ref[...] + off_ref[...]
    pe = jnp.sin(angle)                                    # one EUP transcendental / element

    # dropout == identity (inference mode)
    o_ref[...] = (x_ref[...].astype(jnp.float32) + pe).astype(o_ref.dtype)


def positional_encoding(x, *, max_len=2000, block_rows=None):
    """x: [seq, batch, d_model] (seq-major, like the PyTorch module)."""
    S, B, D = x.shape
    if S > max_len:
        raise ValueError(f"seq_len {S} exceeds max_len {max_len}")
    if D % 2 != 0:
        raise ValueError("d_model must be even")

    BD = B * D
    itemsize = x.dtype.itemsize
    sublane = {4: 8, 2: 16, 1: 32}.get(itemsize, 8)        # dtype-aware sublane tile

    # ---- fold k consecutive seq positions into the lane axis (lane-dense IO) ----
    # smallest k dividing S with (k * BD) % 128 == 0
    k = 1
    for cand in range(1, S + 1):
        if S % cand == 0 and (cand * BD) % 128 == 0:
            k = cand
            break
    # grow the lane width toward >= 512 while keeping enough folded rows for
    # at least two sublane-aligned blocks (so the grid can still be split).
    if (k * BD) % 128 == 0:
        grew = True
        while grew and k * BD < 512:
            grew = False
            for cand in range(k + 1, S + 1):
                if (S % cand == 0 and (cand * BD) % 128 == 0
                        and S // cand >= 2 * sublane):
                    k, grew = cand, True
                    break

    R, L = S // k, k * BD
    x2 = x.reshape(R, L)                                   # free row-major reshape

    # ---- tiny per-column vectors (rank-1 separable PE), exact integer math ----
    c = jnp.arange(L, dtype=jnp.int32)
    s_off = c // BD                                        # seq offset inside the fold
    d = (c % BD) % D                                       # feature index
    parity = d % 2
    w = jnp.exp((d - parity).astype(jnp.float32) * (-math.log(10000.0) / D))
    freq_row = (float(k) * w)[None, :].astype(jnp.float32)              # (1, L)
    off_row = (s_off.astype(jnp.float32) * w
               + parity.astype(jnp.float32) * (math.pi / 2))[None, :]   # (1, L)
    # pe[pos, d] = sin(pos*w + parity*pi/2) with pos = row*k + s_off
    #            = sin(row*(k*w) + s_off*w + parity*pi/2)

    # ---- seq tiling: ~6 MiB per block buffer, sublane-aligned, grid >= 2 when possible
    if block_rows is None:
        per_buffer_budget = 6 * 1024 * 1024
        block_rows = max(sublane, per_buffer_budget // (L * itemsize))
    if block_rows >= R:
        half = (R // 2) // sublane * sublane               # try 2 blocks for megacore
        block_rows = half if half >= sublane else R
    else:
        block_rows = max(sublane, block_rows // sublane * sublane)
    block_rows = int(min(block_rows, R))
    grid = (pl.cdiv(R, block_rows),)

    row_spec = pl.BlockSpec((1, L), lambda i: (0, 0))      # VMEM-resident constants
    x_spec = pl.BlockSpec((block_rows, L), lambda i: (i, 0))

    cost = pl.CostEstimate(
        flops=3 * S * BD,                                  # fma + add per element
        transcendentals=S * BD,                            # one sin per element
        bytes_accessed=2 * S * BD * itemsize + 2 * L * 4,
    )

    out = pl.pallas_call(
        _pos_encoding_kernel,
        out_shape=jax.ShapeDtypeStruct((R, L), x.dtype),
        grid=grid,
        in_specs=[row_spec, row_spec, x_spec],
        out_specs=x_spec,
        compiler_params=pltpu.CompilerParams(
            dimension_semantics=("parallel",),             # megacore-shardable
            vmem_limit_bytes=32 * 1024 * 1024,
        ),
        cost_estimate=cost,
    )(freq_row, off_row, x2)
    return out.reshape(S, B, D)


def _reference(x, max_len=2000):
    """Pure-JAX replica of the PyTorch module (eval mode)."""
    S, B, D = x.shape
    position = jnp.arange(max_len, dtype=jnp.float32)[:, None]
    div_term = jnp.exp(
        jnp.arange(0, D, 2, dtype=jnp.float32) * (-math.log(10000.0) / D))
    pe = jnp.zeros((max_len, D), dtype=jnp.float32)
    pe = pe.at[:, 0::2].set(jnp.sin(position * div_term))
    pe = pe.at[:, 1::2].set(jnp.cos(position * div_term))
    return x + pe[:S][:, None, :]


if __name__ == "__main__":
    # Small deterministic example: (seq, batch, d_model) = (64, 2, 32).
    # Fold logic gives a (16, 256) lane-dense layout with a 2-step grid.
    S, B, D = 64, 2, 32
    key = jax.random.PRNGKey(0)
    x = jax.random.normal(key, (S, B, D), dtype=jnp.float32)

    out = positional_encoding(x)
    jax.block_until_ready(out)

    ref = _reference(x)
    max_err = float(jnp.max(jnp.abs(out - ref)))
    assert jnp.allclose(out, ref, atol=1e-3, rtol=1e-3), f"max err {max_err}"
    print("KERNEL_OK")
</pallas_src>

<mosaic_0001>
module attributes {stable_mosaic.version = 11 : i64} {
  func.func @_pos_encoding_kernel(%arg0: i32, %arg1: memref<1x256xf32, #tpu.memory_space<vmem>>, %arg2: memref<1x256xf32, #tpu.memory_space<vmem>>, %arg3: memref<8x256xf32, #tpu.memory_space<vmem>>, %arg4: memref<8x256xf32, #tpu.memory_space<vmem>>) attributes {dimension_semantics = [#tpu.dimension_semantics<parallel>], iteration_bounds = array<i64: 2>, scalar_prefetch = 0 : i64, scratch_operands = 0 : i64, tpu.core_type = #tpu.core_type<tc>, window_params = [{pipeline_mode = #tpu.pipeline_mode<synchronous>, transform_indices = @transform_0, window_bounds = array<i64: 1, 256>}, {pipeline_mode = #tpu.pipeline_mode<synchronous>, transform_indices = @transform_1, window_bounds = array<i64: 1, 256>}, {transform_indices = @transform_2, window_bounds = array<i64: 8, 256>}, {transform_indices = @transform_3, window_bounds = array<i64: 8, 256>}]} {
    %c8_i32 = arith.constant 8 : i32
    %0 = arith.muli %arg0, %c8_i32 : i32
    %1 = arith.sitofp %0 : i32 to f32
    %2 = tpu.iota {dimensions = array<i32: 0>} : vector<8x1xi32>
    %3 = arith.sitofp %2 : vector<8x1xi32> to vector<8x1xf32>
    %4 = vector.broadcast %1 : f32 to vector<8x1xf32>
    %5 = arith.addf %4, %3 : vector<8x1xf32>
    %c0 = arith.constant 0 : index
    %c0_0 = arith.constant 0 : index
    %6 = vector.load %arg1[%c0, %c0_0] : memref<1x256xf32, #tpu.memory_space<vmem>>, vector<1x256xf32>
    %7 = vector.broadcast %5 : vector<8x1xf32> to vector<8x256xf32>
    %8 = vector.broadcast %6 : vector<1x256xf32> to vector<8x256xf32>
    %9 = arith.mulf %7, %8 : vector<8x256xf32>
    %c0_1 = arith.constant 0 : index
    %c0_2 = arith.constant 0 : index
    %10 = vector.load %arg2[%c0_1, %c0_2] : memref<1x256xf32, #tpu.memory_space<vmem>>, vector<1x256xf32>
    %11 = vector.broadcast %10 : vector<1x256xf32> to vector<8x256xf32>
    %12 = arith.addf %9, %11 : vector<8x256xf32>
    %13 = math.sin %12 : vector<8x256xf32>
    %c0_3 = arith.constant 0 : index
    %c0_4 = arith.constant 0 : index
    %14 = vector.load %arg3[%c0_3, %c0_4] : memref<8x256xf32, #tpu.memory_space<vmem>>, vector<8x256xf32>
    %15 = arith.addf %14, %13 : vector<8x256xf32>
    %c0_5 = arith.constant 0 : index
    %c0_6 = arith.constant 0 : index
    %16 = vector.load %arg4[%c0_5, %c0_6] : memref<8x256xf32, #tpu.memory_space<vmem>>, vector<8x256xf32>
    tpu.vector_store %arg4[%c0_5, %c0_6], %15 {strides = array<i32>} : memref<8x256xf32, #tpu.memory_space<vmem>>, vector<8x256xf32>,
    return
  }
  func.func @transform_0(%arg0: i32) -> (i32, i32) {
    %c0_i32 = arith.constant 0 : i32
    %c0_i32_0 = arith.constant 0 : i32
    %c0_i32_1 = arith.constant 0 : i32
    return %c0_i32, %c0_i32_0 : i32, i32
  }
  func.func @transform_1(%arg0: i32) -> (i32, i32) {
    %c0_i32 = arith.constant 0 : i32
    %c0_i32_0 = arith.constant 0 : i32
    %c0_i32_1 = arith.constant 0 : i32
    return %c0_i32, %c0_i32_0 : i32, i32
  }
  func.func @transform_2(%arg0: i32) -> (i32, i32) {
    %c0_i32 = arith.constant 0 : i32
    %c0_i32_0 = arith.constant 0 : i32
    return %arg0, %c0_i32 : i32, i32
  }
  func.func @transform_3(%arg0: i32) -> (i32, i32) {
    %c0_i32 = arith.constant 0 : i32
    %c0_i32_0 = arith.constant 0 : i32
    return %arg0, %c0_i32 : i32, i32
  }
}

</mosaic_0001>

<llo_original>
// kernel: tpu_custom_call.1
$region0: #{tpu_custom_call.1}
  #allocation0 [shape = 'u32[]', space=smem, size = 0x4, offset = 0x4, fixed_abs, tag = 'smem constant byte address 0x4 - core index']
  #allocation1 [shape = 'u32[144,128]{1,0:T(1,128)}', space=vmem, size = 0x12000, scoped, tag = 'internal scratch']
  %s0 = inlined_call_operand.hbm [shape: f32[1,256], index: 0, kind: input, shape index: {}]
  %s1 = inlined_call_operand.vmem [shape: f32[1,256], index: 1, kind: input, shape index: {}]
  %s2 = inlined_call_operand.hbm [shape: f32[16,256], index: 2, kind: input, shape index: {}]
  %s3 = inlined_call_operand.hbm [shape: f32[16,256], index: 3, kind: output, shape index: {}]
  %s4 = sld [smem:[#allocation0]]
  $region53: #{tpu_custom_call.1} parent=0
    _
  %s6 = ssub.s32 1, %s4
  %s7 = scalar_select 0, %s6, %s4
  $region1: #{tpu_custom_call.1} parent=0
    #allocation2 [shape = 'u8[1024]{0}', space=vmem, size = 0x400, scoped, tag = 'input window, operand 0, single buffered']
    #allocation3 [shape = 's32[2]{0}', space=sflag, size = 0x8, scoped, tag = 'scoped memory for tpu_custom_call.1']
    #allocation4 [shape = 's32[2]{0}', space=sflag, size = 0x8, scoped, tag = 'scoped memory for tpu_custom_call.1']
    #allocation5 [shape = 'u8[16384]{0}', space=vmem, size = 0x4000, scoped, tag = 'input window, operand 2']
    #allocation6 [shape = 's32[2]{0}', space=sflag, size = 0x8, scoped, tag = 'scoped memory for tpu_custom_call.1']
    #allocation7 [shape = 'u8[16384]{0}', space=vmem, size = 0x4000, scoped, tag = 'output window, operand 0']
    %8 = vsyncpa [#allocation3], 0
    %9 = vsyncpa [#allocation6], 0
    %s10 = scalar_lea.sflag [#allocation6], 1
    %11 = vsyncpa %s10, 0
    %12 = vsyncpa [#allocation4], 0
    %s13 = scalar_lea.sflag [#allocation4], 1
    %14 = vsyncpa %s13, 0
    loop: start=0, step=1, limit=4
    $region2: #{tpu_custom_call.1} parent=1 // loop_pre_header
      _
    $region3: #{tpu_custom_call.1} parent=1 // loop_header
      %s16 = sphi 0, %s20
      %p17 = scmp.ge.s32.totalorder %s16, 4
      %s24 = sphi 0, %s24
      %s26 = sphi 0, %s24
      %s27 = sphi 0, %s26
      %s41 = sphi 0, %s27
      %s45 = sphi 0, %s45
      %s47 = sphi 0, %s45
      %s48 = sphi 0, %s47
      %s62 = sphi 0, %s48
      %s68 = sphi 0, %s70
      %s71 = sphi 0, %s68
      %s72 = sphi 0, %s71
      %s88 = sphi 0, %s72
      %s94 = sphi 0, %s96
      %s97 = sphi 0, %s94
      %s98 = sphi 0, %s97
      %s114 = sphi 0, %s98
    $region4: #{tpu_custom_call.1} parent=1 // loop_header_branch
      %19 = sbr.rel (%p17) target = $region8
    $region5: #{tpu_custom_call.1} parent=1 // loop_body
      %s21 = ssub.s32 %s16, 1
      %s22 = ssub.s32 %s16, 2
      %s23 = sadd.s32 %s16, 1
      %s25 = sadd.s32 %s24, 1
      %p28 = scmp.eq.s32.totalorder %s16, 1
      %p29 = scmp.ne.s32.totalorder %s24, %s26
      %p30 = scmp.eq.s32.totalorder %s16, 0
      %p31 = por %p29, %p30
      %p32 = scmp.ne.s32.totalorder %s24, %s26
      %p33 = scmp.eq.s32.totalorder %s21, 1
      %p34 = por %p32, %p33
      %p35 = scmp.ne.s32.totalorder %s26, %s27
      %p36 = scmp.eq.s32.totalorder %s21, 0
      %p37 = por %p35, %p36
      %p38 = scmp.ne.s32.totalorder %s26, %s27
      %p39 = scmp.eq.s32.totalorder %s22, 1
      %p40 = por %p38, %p39
      %p42 = scmp.ne.s32.totalorder %s27, %s41
      %p43 = scmp.eq.s32.totalorder %s22, 0
      %p44 = por %p42, %p43
      %s46 = sadd.s32 %s45, 1
      %p49 = scmp.eq.s32.totalorder %s16, 1
      %p50 = scmp.ne.s32.totalorder %s45, %s47
      %p51 = scmp.eq.s32.totalorder %s16, 0
      %p52 = por %p50, %p51
      %p53 = scmp.ne.s32.totalorder %s45, %s47
      %p54 = scmp.eq.s32.totalorder %s21, 1
      %p55 = por %p53, %p54
      %p56 = scmp.ne.s32.totalorder %s47, %s48
      %p57 = scmp.eq.s32.totalorder %s21, 0
      %p58 = por %p56, %p57
      %p59 = scmp.ne.s32.totalorder %s47, %s48
      %p60 = scmp.eq.s32.totalorder %s22, 1
      %p61 = por %p59, %p60
      %p63 = scmp.ne.s32.totalorder %s48, %s62
      %p64 = scmp.eq.s32.totalorder %s22, 0
      %p65 = por %p63, %p64
      %s66 = ssub.s32 %s16, %s23
      %p67 = scmp.eq.s32.totalorder %s66, 0
      %s69 = sadd.s32 %s68, 1
      %s70 = scalar_select %p67, %s68, %s69
      %p73 = pneg %p67
      %p74 = scmp.eq.s32.totalorder %s16, 1
      %p75 = por %p73, %p74
      %p76 = scmp.ne.s32.totalorder %s68, %s71
      %p77 = scmp.eq.s32.totalorder %s16, 0
      %p78 = por %p76, %p77
      %p79 = scmp.ne.s32.totalorder %s68, %s71
      %p80 = scmp.eq.s32.totalorder %s21, 1
      %p81 = por %p79, %p80
      %p82 = scmp.ne.s32.totalorder %s71, %s72
      %p83 = scmp.eq.s32.totalorder %s21, 0
      %p84 = por %p82, %p83
      %p85 = scmp.ne.s32.totalorder %s71, %s72
      %p86 = scmp.eq.s32.totalorder %s22, 1
      %p87 = por %p85, %p86
      %p89 = scmp.ne.s32.totalorder %s72, %s88
      %p90 = scmp.eq.s32.totalorder %s22, 0
      %p91 = por %p89, %p90
      %s92 = ssub.s32 %s16, %s23
      %p93 = scmp.eq.s32.totalorder %s92, 0
      %s95 = sadd.s32 %s94, 1
      %s96 = scalar_select %p93, %s94, %s95
      %p99 = pneg %p93
      %p100 = scmp.eq.s32.totalorder %s16, 1
      %p101 = por %p99, %p100
      %p102 = scmp.ne.s32.totalorder %s94, %s97
      %p103 = scmp.eq.s32.totalorder %s16, 0
      %p104 = por %p102, %p103
      %p105 = scmp.ne.s32.totalorder %s94, %s97
      %p106 = scmp.eq.s32.totalorder %s21, 1
      %p107 = por %p105, %p106
      %p108 = scmp.ne.s32.totalorder %s97, %s98
      %p109 = scmp.eq.s32.totalorder %s21, 0
      %p110 = por %p108, %p109
      %p111 = scmp.ne.s32.totalorder %s97, %s98
      %p112 = scmp.eq.s32.totalorder %s22, 1
      %p113 = por %p111, %p112
      %p115 = scmp.ne.s32.totalorder %s98, %s114
      %p116 = scmp.eq.s32.totalorder %s22, 0
      %p117 = por %p115, %p116
      %p118 = scmp.le.s32.totalorder 1, %s16
      %p119 = scmp.lt.s32.totalorder %s16, 3
      %p120 = pnand %p118, %p119
      %p121 = pneg %p120
      // Predicated region
      $region9: #{tpu_custom_call.1} parent=5 // pred_check
        _
      $region10: #{tpu_custom_call.1} parent=5 // pred_check_branch
        %123 = sbr.rel (%p120) target = $region12
      $region11: #{tpu_custom_call.1} parent=5 // pred_region
        %s124 = ssub.s32 %s16, 1
        // Predicated region
        $region13: #{tpu_custom_call.1} parent=11 // pred_check
          %p125 = pneg %p37
        $region14: #{tpu_custom_call.1} parent=11 // pred_check_branch
          %127 = sbr.rel (%p125) target = $region16
        $region15: #{tpu_custom_call.1} parent=11 // pred_region
          %s129 = ssub.s32 32, 32
          %130 = vsyncadd [#allocation3], %s129
          %s132 = sshll.u32 [#allocation2], 4
          %s133 = int_to_ptr.vmem [resolvable:$true] %s132
          %135 = dma.hbm_to_vmem [thread:$0]  %s0, 32, %s133, [#allocation3]
        $region16: #{tpu_custom_call.1} parent=11 // pred_fallthru
          _
        // Predicated region
        $region17: #{tpu_custom_call.1} parent=11 // pred_check
          %p136 = pneg %p58
        $region18: #{tpu_custom_call.1} parent=11 // pred_check_branch
          %138 = sbr.rel (%p136) target = $region20
        $region19: #{tpu_custom_call.1} parent=11 // pred_region
          _
        $region20: #{tpu_custom_call.1} parent=11 // pred_fallthru
          _
      $region12: #{tpu_custom_call.1} parent=5 // pred_fallthru
        _
      %p139 = scmp.lt.s32.totalorder %s16, 2
      // Predicated region
      $region21: #{tpu_custom_call.1} parent=5 // pred_check
        %p140 = pneg %p139
      $region22: #{tpu_custom_call.1} parent=5 // pred_check_branch
        %142 = sbr.rel (%p140) target = $region24
      $region23: #{tpu_custom_call.1} parent=5 // pred_region
        // Predicated region
        $region25: #{tpu_custom_call.1} parent=23 // pred_check
          %p143 = pneg %p78
        $region26: #{tpu_custom_call.1} parent=23 // pred_check_branch
          %145 = sbr.rel (%p143) target = $region28
        $region27: #{tpu_custom_call.1} parent=23 // pred_region
          %s146 = sand.u32 %s68, 1
          %s147 = scalar_lea.sflag [#allocation6], %s146
          %s148 = sand.u32 %s68, 1
          %s149 = smul.addr %s148, 16
          %s150 = scalar_lea.vmem [#allocation5], %s149
          %s152 = ssub.s32 256, 256
          %153 = vsyncadd %s147, %s152
          %s154 = smul.addr %s16, 2
          %s155 = smul.addr %s154, 128
          %s156 = scalar_lea.hbm %s2, %s155
          %s158 = sshll.u32 %s150, 4
          %s159 = int_to_ptr.vmem [resolvable:$true] %s158
          %161 = dma.hbm_to_vmem [thread:$0]  %s156, 256, %s159, %s147
        $region28: #{tpu_custom_call.1} parent=23 // pred_fallthru
          _
      $region24: #{tpu_custom_call.1} parent=5 // pred_fallthru
        _
      %p162 = scmp.le.s32.totalorder 1, %s16
      %p163 = scmp.lt.s32.totalorder %s16, 3
      %p164 = pnand %p162, %p163
      %p165 = pneg %p164
      // Predicated region
      $region29: #{tpu_custom_call.1} parent=5 // pred_check
        _
      $region30: #{tpu_custom_call.1} parent=5 // pred_check_branch
        %167 = sbr.rel (%p164) target = $region32
      $region31: #{tpu_custom_call.1} parent=5 // pred_region
        %s168 = ssub.s32 %s16, 1
        // Predicated region
        $region33: #{tpu_custom_call.1} parent=31 // pred_check
          %p169 = pneg %p37
        $region34: #{tpu_custom_call.1} parent=31 // pred_check_branch
          %171 = sbr.rel (%p169) target = $region36
        $region35: #{tpu_custom_call.1} parent=31 // pred_region
          %172 = dma.done [#allocation3], 32
        $region36: #{tpu_custom_call.1} parent=31 // pred_fallthru
          _
        %s173 = sand.u32 %s71, 1
        %s174 = scalar_lea.sflag [#allocation6], %s173
        %s175 = sand.u32 %s71, 1
        %s176 = smul.addr %s175, 16
        %s177 = scalar_lea.vmem [#allocation5], %s176
        // Predicated region
        $region37: #{tpu_custom_call.1} parent=31 // pred_check
          %p178 = pneg %p84
        $region38: #{tpu_custom_call.1} parent=31 // pred_check_branch
          %180 = sbr.rel (%p178) target = $region40
        $region39: #{tpu_custom_call.1} parent=31 // pred_region
          %181 = dma.done %s174, 256
        $region40: #{tpu_custom_call.1} parent=31 // pred_fallthru
          _
        %p182 = pneg %p37
        %p183 = pneg %p34
        %p184 = pneg %p58
        %p185 = pneg %p55
        %s186 = sand.u32 %s71, 1
        %s187 = scalar_lea.sflag [#allocation6], %s186
        %s188 = sand.u32 %s71, 1
        %s189 = smul.addr %s188, 16
        %s190 = scalar_lea.vmem [#allocation5], %s189
        %p191 = pneg %p84
        %p192 = pneg %p81
        %p193 = pneg %p110
        %p194 = pneg %p107
        %s195 = sand.u32 %s97, 1
        %s196 = scalar_lea.sflag [#allocation4], %s195
        %s197 = sand.u32 %s97, 1
        %s198 = smul.addr %s197, 16
        %s199 = scalar_lea.vmem [#allocation7], %s198
        %s200 = smul.u32 %s21, 8
        %s201 = scvt.s32.f32 %s200
        %v202 = vlaneseq
        %v203 = vshrl.u32 %v202, 7
        %v204 = vcvt.s32.f32 %v203
        %v205 = vstv %s201
        %v206 = vadd.f32 %v205, %v204
        %v207 = vld [vmem:[#allocation2] sm:$0x3]
        %v209 = vlaneseq
        %v210 = vshrl.u32 %v209, 7
        %v211 = vsub.s32 0, %v210
        %v212 = vrot.slane %v207, %v211
        %v213 = vlaneseq
        %v214 = vshrl.u32 %v213, 7
        %v215 = vsub.s32 1, %v214
        %v216 = vrot.slane %v207, %v215
        %v219 = vmul.f32 %v206, %v212
        %v220 = vmul.f32 %v206, %v216
        %v221 = vld [vmem:[%s1] sm:$0x3]
        %v223 = vlaneseq
        %v224 = vshrl.u32 %v223, 7
        %v225 = vsub.s32 0, %v224
        %v226 = vrot.slane %v221, %v225
        %v227 = vlaneseq
        %v228 = vshrl.u32 %v227, 7
        %v229 = vsub.s32 1, %v228
        %v230 = vrot.slane %v221, %v229
        %v233 = vadd.f32 %v219, %v226
        %v234 = vadd.f32 %v220, %v230
        %v235 = vand.u32 2147483647, %v233
        %vm236 = vcmp.le.f32.partialorder %v235, 0.7853982
        %vm237 = vcmp.lt.s32.totalorder %v233, 0
        %v238 = vand.u32 %v233, 2139095040
        %v239 = vshrl.u32 %v238, 23
        %v240 = vsub.s32 %v239, 127
        %v241 = vand.u32 2147483647, %v233
        %v242 = vand.u32 %v241, 8388607
        %v243 = vor.u32 %v242, 8388608
        %v244 = vsub.s32 0, %v243
        %v245 = vadd.s32 %v240, 1
        %vm246 = vcmp.gt.s32.totalorder %v245, 0
        %v247 = vsel %vm246, %v245, 0
        %v248 = vshrl.u32 %v247, 5
        %v249 = vand.u32 %v247, 31
        %v250 = vsub.s32 32, %v249
        %v251 = vshrl.u32 683565275, %v250
        %v252 = vshll.u32 683565275, %v249
        %v253 = vshrl.u32 2475754826, %v250
        %v254 = vor.u32 %v252, %v253
        %v255 = vshll.u32 2475754826, %v249
        %v256 = vshrl.u32 2131351028, %v250
        %v257 = vor.u32 %v255, %v256
        %v258 = vshll.u32 2131351028, %v249
        %v259 = vshrl.u32 2102212464, %v250
        %v260 = vor.u32 %v258, %v259
        %v261 = vshll.u32 2102212464, %v249
        %v262 = vshrl.u32 920167782, %v250
        %v263 = vor.u32 %v261, %v262
        %v264 = vshll.u32 920167782, %v249
        %v265 = vshrl.u32 1326507024, %v250
        %v266 = vor.u32 %v264, %v265
        %vm267 = vcmp.lt.s32.totalorder %v248, 1
        %vm268 = vcmp.lt.s32.totalorder %v248, 2
        %vm269 = vcmp.lt.s32.totalorder %v248, 3
        %vm270 = vcmp.lt.s32.totalorder %v248, 4
        %v271 = vsel %vm267, %v251, %v254
        %v272 = vsel %vm270, %v260, 2102212464
        %v273 = vsel %vm269, %v257, %v272
        %v274 = vsel %vm268, %v271, %v273
        %v275 = vsel %vm267, %v254, %v257
        %v276 = vsel %vm270, %v263, 920167782
        %v277 = vsel %vm269, %v260, %v276
        %v278 = vsel %vm268, %v275, %v277
        %v279 = vsel %vm267, %v257, %v260
        %v280 = vsel %vm270, %v266, 1326507024
        %v281 = vsel %vm269, %v263, %v280
        %v282 = vsel %vm268, %v279, %v281
        %v283 = vshll.u32 %v243, 8
        %v284 = vmul.u32.u64.compose %v283, %v282
        %v285 = vextract.low.u32 %v284
        %v286 = vextract.high.u32 %v284
        %v287 = vmul.u32.u64.compose %v283, %v278
        %v288 = vextract.low.u32 %v287
        %v289 = vextract.high.u32 %v287
        %v290 = vmul.u32 %v283, %v274
        %v291 = vadd.s32 %v286, %v288
        %vm292 = vc.u32 %v286, %v288
        %v293 = vadd.s32 %v289, 1
        %v294 = vsel %vm292, %v293, %v289
        %v295 = vadd.s32 %v290, %v294
        %v296 = vadd.s32 %v295, 536870912
        %v297 = vshrl.u32 %v296, 30
        %v298 = vshll.u32 %v297, 30
        %v299 = vsub.s32 %v295, %v298
        %vm300 = vcmp.lt.s32.totalorder %v299, 0
        %v301 = vsub.s32 0, %v299
        %v302 = vsel %vm300, %v301, %v299
        %v303 = vclz %v302
        %v304 = vsub.s32 %v303, 2
        %vm305 = vcmp.gt.s32.totalorder 0, %v304
        %v306 = vsel %vm305, 0, %v304
        %v307 = vsub.s32 32, %v306
        %v308 = vshll.u32 %v299, %v306
        %v309 = vshrl.u32 %v291, %v307
        %v310 = vor.u32 %v308, %v309
        %v311 = vsub.s32 4294967266, %v306
        %v312 = vadd.s32 %v311, 127
        %v313 = vshll.u32 %v312, 23
        %v314 = vor.u32 4788187, %v313
        %v315 = vand.u32 2147483647, %v314
        %v317 = vcvt.s32.f32 %v310
        %v318 = vmul.f32 %v317, %v315
        %v319 = vxor.u32 %v318, 2147483648
        %v320 = vsel %vm237, %v319, %v318
        %v321 = vsub.s32 4, %v297
        %v322 = vsel %vm237, %v321, %v297
        %v323 = vsel %vm236, %v233, %v320
        %v324 = vsel %vm236, 0, %v322
        %v325 = vcosq.f32.pop %v323
        %v326 = vsinq.f32.pop %v323
        %vm327 = vweird.f32 %v233
        %v328 = vadd.s32 %v324, 3
        %v329 = vand.u32 %v328, 3
        %vm330 = vcmp.lt.s32.totalorder %v329, 2
        %vm331 = vcmp.eq.s32.totalorder %v329, 0
        %v332 = vxor.u32 %v326, 2147483648
        %v333 = vsel %vm331, %v325, %v332
        %vm334 = vcmp.eq.s32.totalorder %v329, 2
        %v335 = vxor.u32 %v325, 2147483648
        %v336 = vsel %vm334, %v335, %v326
        %v337 = vsel %vm330, %v333, %v336
        %v338 = vsel %vm327, nan, %v337
        %v339 = vand.u32 2147483647, %v234
        %vm340 = vcmp.le.f32.partialorder %v339, 0.7853982
        %vm341 = vcmp.lt.s32.totalorder %v234, 0
        %v342 = vand.u32 %v234, 2139095040
        %v343 = vshrl.u32 %v342, 23
        %v344 = vsub.s32 %v343, 127
        %v345 = vand.u32 2147483647, %v234
        %v346 = vand.u32 %v345, 8388607
        %v347 = vor.u32 %v346, 8388608
        %v348 = vsub.s32 0, %v347
        %v349 = vadd.s32 %v344, 1
        %vm350 = vcmp.gt.s32.totalorder %v349, 0
        %v351 = vsel %vm350, %v349, 0
        %v352 = vshrl.u32 %v351, 5
        %v353 = vand.u32 %v351, 31
        %v354 = vsub.s32 32, %v353
        %v355 = vshrl.u32 683565275, %v354
        %v356 = vshll.u32 683565275, %v353
        %v357 = vshrl.u32 2475754826, %v354
        %v358 = vor.u32 %v356, %v357
        %v359 = vshll.u32 2475754826, %v353
        %v360 = vshrl.u32 2131351028, %v354
        %v361 = vor.u32 %v359, %v360
        %v362 = vshll.u32 2131351028, %v353
        %v363 = vshrl.u32 2102212464, %v354
        %v364 = vor.u32 %v362, %v363
        %v365 = vshll.u32 2102212464, %v353
        %v366 = vshrl.u32 920167782, %v354
        %v367 = vor.u32 %v365, %v366
        %v368 = vshll.u32 920167782, %v353
        %v369 = vshrl.u32 1326507024, %v354
        %v370 = vor.u32 %v368, %v369
        %vm371 = vcmp.lt.s32.totalorder %v352, 1
        %vm372 = vcmp.lt.s32.totalorder %v352, 2
        %vm373 = vcmp.lt.s32.totalorder %v352, 3
        %vm374 = vcmp.lt.s32.totalorder %v352, 4
        %v375 = vsel %vm371, %v355, %v358
        %v376 = vsel %vm374, %v364, 2102212464
        %v377 = vsel %vm373, %v361, %v376
        %v378 = vsel %vm372, %v375, %v377
        %v379 = vsel %vm371, %v358, %v361
        %v380 = vsel %vm374, %v367, 920167782
        %v381 = vsel %vm373, %v364, %v380
        %v382 = vsel %vm372, %v379, %v381
        %v383 = vsel %vm371, %v361, %v364
        %v384 = vsel %vm374, %v370, 1326507024
        %v385 = vsel %vm373, %v367, %v384
        %v386 = vsel %vm372, %v383, %v385
        %v387 = vshll.u32 %v347, 8
        %v388 = vmul.u32.u64.compose %v387, %v386
        %v389 = vextract.low.u32 %v388
        %v390 = vextract.high.u32 %v388
        %v391 = vmul.u32.u64.compose %v387, %v382
        %v392 = vextract.low.u32 %v391
        %v393 = vextract.high.u32 %v391
        %v394 = vmul.u32 %v387, %v378
        %v395 = vadd.s32 %v390, %v392
        %vm396 = vc.u32 %v390, %v392
        %v397 = vadd.s32 %v393, 1
        %v398 = vsel %vm396, %v397, %v393
        %v399 = vadd.s32 %v394, %v398
        %v400 = vadd.s32 %v399, 536870912
        %v401 = vshrl.u32 %v400, 30
        %v402 = vshll.u32 %v401, 30
        %v403 = vsub.s32 %v399, %v402
        %vm404 = vcmp.lt.s32.totalorder %v403, 0
        %v405 = vsub.s32 0, %v403
        %v406 = vsel %vm404, %v405, %v403
        %v407 = vclz %v406
        %v408 = vsub.s32 %v407, 2
        %vm409 = vcmp.gt.s32.totalorder 0, %v408
        %v410 = vsel %vm409, 0, %v408
        %v411 = vsub.s32 32, %v410
        %v412 = vshll.u32 %v403, %v410
        %v413 = vshrl.u32 %v395, %v411
        %v414 = vor.u32 %v412, %v413
        %v415 = vsub.s32 4294967266, %v410
        %v416 = vadd.s32 %v415, 127
        %v417 = vshll.u32 %v416, 23
        %v418 = vor.u32 4788187, %v417
        %v419 = vand.u32 2147483647, %v418
        %v421 = vcvt.s32.f32 %v414
        %v422 = vmul.f32 %v421, %v419
        %v423 = vxor.u32 %v422, 2147483648
        %v424 = vsel %vm341, %v423, %v422
        %v425 = vsub.s32 4, %v401
        %v426 = vsel %vm341, %v425, %v401
        %v427 = vsel %vm340, %v234, %v424
        %v428 = vsel %vm340, 0, %v426
        %v429 = vcosq.f32.pop %v427
        %v430 = vsinq.f32.pop %v427
        %vm431 = vweird.f32 %v234
        %v432 = vadd.s32 %v428, 3
        %v433 = vand.u32 %v432, 3
        %vm434 = vcmp.lt.s32.totalorder %v433, 2
        %vm435 = vcmp.eq.s32.totalorder %v433, 0
        %v436 = vxor.u32 %v430, 2147483648
        %v437 = vsel %vm435, %v429, %v436
        %vm438 = vcmp.eq.s32.totalorder %v433, 2
        %v439 = vxor.u32 %v429, 2147483648
        %v440 = vsel %vm438, %v439, %v430
        %v441 = vsel %vm434, %v437, %v440
        %v442 = vsel %vm431, nan, %v441
        %v443 = vld [vmem:[%s177] sm:$0xff]
        %v444 = vld [vmem:[%s177 + $0x8] sm:$0xff]
        %v445 = vadd.f32 %v443, %v338
        %v446 = vadd.f32 %v444, %v442
        %447 = vst [vmem:[%s199] sm:$0xff] %v445
        %448 = vst [vmem:[%s199 + $0x8] sm:$0xff] %v446
        %s449 = sand.u32 %s97, 1
        %s450 = scalar_lea.sflag [#allocation4], %s449
        %s451 = sand.u32 %s97, 1
        %s452 = smul.addr %s451, 16
        %s453 = scalar_lea.vmem [#allocation7], %s452
        // Predicated region
        $region41: #{tpu_custom_call.1} parent=31 // pred_check
          %p454 = pneg %p107
        $region42: #{tpu_custom_call.1} parent=31 // pred_check_branch
          %456 = sbr.rel (%p454) target = $region44
        $region43: #{tpu_custom_call.1} parent=31 // pred_region
          %s458 = ssub.s32 256, 256
          %459 = vsyncadd %s450, %s458
          %s460 = smul.addr %s21, 2
          %s461 = smul.addr %s460, 128
          %s462 = scalar_lea.hbm %s3, %s461
          %s464 = sshll.u32 %s453, 4
          %s465 = int_to_ptr.vmem [resolvable:$true] %s464
          %467 = dma.vmem_to_hbm [thread:$0]  %s465, 256, %s462, %s450
        $region44: #{tpu_custom_call.1} parent=31 // pred_fallthru
          _
      $region32: #{tpu_custom_call.1} parent=5 // pred_fallthru
        _
      %p468 = scmp.le.s32.totalorder 2, %s16
      // Predicated region
      $region45: #{tpu_custom_call.1} parent=5 // pred_check
        %p469 = pneg %p468
      $region46: #{tpu_custom_call.1} parent=5 // pred_check_branch
        %471 = sbr.rel (%p469) target = $region48
      $region47: #{tpu_custom_call.1} parent=5 // pred_region
        %s472 = ssub.s32 %s16, 2
        // Predicated region
        $region49: #{tpu_custom_call.1} parent=47 // pred_check
          %p473 = pneg %p113
        $region50: #{tpu_custom_call.1} parent=47 // pred_check_branch
          %475 = sbr.rel (%p473) target = $region52
        $region51: #{tpu_custom_call.1} parent=47 // pred_region
          %s476 = sand.u32 %s98, 1
          %s477 = scalar_lea.sflag [#allocation4], %s476
          %s478 = sand.u32 %s98, 1
          %s479 = smul.addr %s478, 16
          %s480 = scalar_lea.vmem [#allocation7], %s479
          %481 = dma.done %s477, 256
        $region52: #{tpu_custom_call.1} parent=47 // pred_fallthru
          _
      $region48: #{tpu_custom_call.1} parent=5 // pred_fallthru
        _
    $region6: #{tpu_custom_call.1} parent=1 // loop_footer
      %s20 = sadd.s32 1, %s16
    $region7: #{tpu_custom_call.1} parent=1 // loop_footer_branch
      %15 = sbr.rel target = $region3
    $region8: #{tpu_custom_call.1} parent=1 // loop_exit
      _
    %482 = vsyncpa [#allocation3], 1
    %s483 = scalar_lea.sflag [#allocation3], 1
    %484 = vsyncpa %s483, 1
    %485 = vsyncpa [#allocation6], 1
    %s486 = scalar_lea.sflag [#allocation6], 1
    %487 = vsyncpa %s486, 1
    %488 = vsyncpa [#allocation4], 1
    %s489 = scalar_lea.sflag [#allocation4], 1
    %490 = vsyncpa %s489, 1

</llo_original>
